<compile_context>
chip_gen: v7x
topology: tpu7x:2x2x1
jax: 0.10.0
libtpu: 0.0.40
codegen_flags: <defaults>
</compile_context>

<pallas_src>
import math

import jax
import jax.numpy as jnp
from jax import lax
from jax.experimental import pallas as pl
from jax.experimental.pallas import tpu as pltpu


# --------------------------------- kernel -----------------------------------

def _fused_kernel(x_ref, w_ref, b_ref, m_ref, o_ref):
    """out[i, j, h] = mask[i, j] * (x[j, :] @ W.T + b)[h] for one tile."""
    # y = x @ W.T + b ; contraction on the shared h_in axis expressed via
    # dot_general so no transposed weight is materialized (MXU-native).
    y = lax.dot_general(
        x_ref[...], w_ref[...],
        dimension_numbers=(((1,), (1,)), ((), ())),
        preferred_element_type=jnp.float32)
    y = y + b_ref[...]                                   # (TILE_J, H_out) f32
    m = m_ref[...].astype(jnp.float32)                   # (TILE_I, TILE_J)
    # broadcast-multiply in f32, cast only at the store
    o_ref[...] = (m[:, :, None] * y[None, :, :]).astype(o_ref.dtype)


# -------------------------------- tiling ------------------------------------

def _round_up(x, m):
    return ((x + m - 1) // m) * m


def _vmem_capacity_bytes():
    """Physical VMEM per TensorCore; conservative 64 MiB if query unavailable."""
    try:
        info = pltpu.get_tpu_info()
        cap = getattr(info, "vmem_capacity_bytes", None)
        if cap:
            return int(cap)
    except Exception:
        pass
    return 64 * 1024 * 1024


def _block_bytes(tile_i, tile_j, h_in, h_out, out_itemsize):
    """Double-buffered VMEM working set of one grid step (lane-padded)."""
    padded_h = _round_up(h_out, 128)
    padded_hin = _round_up(h_in, 128)
    out_blk = tile_i * _round_up(tile_j, 8) * padded_h * out_itemsize
    mask_blk = _round_up(tile_i, 8) * _round_up(tile_j, 128) * 4
    x_blk = _round_up(tile_j, 8) * padded_hin * 4
    w_blk = _round_up(h_out, 8) * padded_hin * 4
    b_blk = 8 * padded_h * 4
    return 2 * (out_blk + mask_blk + x_blk + w_blk + b_blk)


def _choose_tiles(nodes, h_in, h_out, out_itemsize):
    vmem = _vmem_capacity_bytes()
    if vmem <= 64 * 1024 * 1024:            # v7x: 64 MiB physical, 2 TCs
        budget, cap_limit, two_tc = 40 << 20, 56 << 20, True
    else:                                   # v5e / v6e: 128 MiB physical
        budget, cap_limit, two_tc = 72 << 20, 100 << 20, False

    # j tile (mask lane axis): full extent when small, else a 128-multiple so
    # the x block (and hence y) stays resident across the inner i loop.
    tile_j = nodes if nodes <= 1024 else 1024

    padded_h = _round_up(h_out, 128)
    padded_hin = _round_up(h_in, 128)
    # double-buffered, tile_i-dependent bytes per i row (output + mask blocks)
    per_i = 2 * (_round_up(tile_j, 8) * padded_h * out_itemsize
                 + _round_up(tile_j, 128) * 4)
    # double-buffered, tile_i-independent bytes (x, W, bias blocks)
    fixed = 2 * (_round_up(tile_j, 8) * padded_hin * 4
                 + _round_up(h_out, 8) * padded_hin * 4
                 + 8 * padded_h * 4)
    cap_i = max(8, (budget - fixed) // per_i)
    if cap_i >= nodes:
        tile_i = nodes
    else:
        tile_i = max(8, (min(cap_i, nodes) // 8) * 8)

    # On 2-TC chips keep >= 2 grid steps so both TensorCores get work.
    if (two_tc and nodes >= 16
            and pl.cdiv(nodes, tile_i) * pl.cdiv(nodes, tile_j) < 2):
        tile_i = _round_up(pl.cdiv(nodes, 2), 8)

    return tile_i, tile_j, cap_limit


def _vmem_limit_bytes(tile_i, tile_j, h_in, h_out, out_itemsize, cap_limit):
    working = _block_bytes(tile_i, tile_j, h_in, h_out, out_itemsize)
    limit = int(working * 1.25) + (2 << 20)       # headroom for Mosaic scratch
    return max(32 << 20, min(cap_limit, limit))


# -------------------------------- wrapper ------------------------------------

def linear_with_mask(x, mask, weight, bias, *, out_dtype=jnp.float32):
    """x: (1, nodes, H_in), mask: (1, nodes, nodes) -> (1, nodes, nodes, H_out)."""
    assert x.shape[0] == 1 and mask.shape[0] == 1, \
        "the original PyTorch broadcast is only well-defined for batch N == 1"
    nodes, h_in = int(x.shape[1]), int(x.shape[2])
    h_out = int(weight.shape[0])
    assert mask.shape[1] == nodes and mask.shape[2] == nodes

    out_dtype = jnp.dtype(out_dtype)
    mask_dtype = jnp.bfloat16 if out_dtype == jnp.bfloat16 else jnp.float32

    x2 = x[0].astype(jnp.float32)                     # (nodes, H_in)
    m2 = mask[0].astype(mask_dtype)                   # (nodes, nodes)
    w2 = weight.astype(jnp.float32)                   # (H_out, H_in)
    b2 = bias.reshape(1, h_out).astype(jnp.float32)   # (1, H_out)

    tile_i, tile_j, cap_limit = _choose_tiles(nodes, h_in, h_out,
                                              out_dtype.itemsize)
    # j outer -> x / W / b blocks stay resident across the inner i loop.
    grid = (pl.cdiv(nodes, tile_j), pl.cdiv(nodes, tile_i))

    out_bytes = out_dtype.itemsize * nodes * nodes * h_out
    out = pl.pallas_call(
        _fused_kernel,
        out_shape=jax.ShapeDtypeStruct((nodes, nodes, h_out), out_dtype),
        grid=grid,
        in_specs=[
            pl.BlockSpec((tile_j, h_in), lambda j, i: (j, 0)),     # x (j-resident)
            pl.BlockSpec((h_out, h_in), lambda j, i: (0, 0)),      # W (resident)
            pl.BlockSpec((1, h_out), lambda j, i: (0, 0)),         # b (resident)
            pl.BlockSpec((tile_i, tile_j), lambda j, i: (i, j)),   # mask
        ],
        out_specs=pl.BlockSpec((tile_i, tile_j, h_out),
                               lambda j, i: (i, j, 0)),
        compiler_params=pltpu.CompilerParams(
            dimension_semantics=("parallel", "parallel"),
            vmem_limit_bytes=_vmem_limit_bytes(
                tile_i, tile_j, h_in, h_out, out_dtype.itemsize, cap_limit)),
        cost_estimate=pl.CostEstimate(
            flops=2 * nodes * h_in * h_out * grid[1]      # y recomputed per i step
                  + nodes * nodes * h_out,                # mask multiply
            transcendentals=0,
            bytes_accessed=out_bytes
                           + m2.dtype.itemsize * nodes * nodes
                           + 4 * (nodes * h_in + h_out * h_in + h_out)),
    )(x2, w2, b2, m2)

    return out[None, ...]                                  # (1, nodes, nodes, H_out)


def init_params(key, in_features, out_features):
    """Deterministic init matching nn.Linear.reset_parameters semantics."""
    kw, kb = jax.random.split(key)
    bound = 1.0 / math.sqrt(in_features)        # kaiming_uniform_(a=sqrt(5))
    weight = jax.random.uniform(
        kw, (out_features, in_features), jnp.float32, -bound, bound)
    bias = jax.random.uniform(kb, (out_features,), jnp.float32, -bound, bound)
    return weight, bias


if __name__ == "__main__":
    key = jax.random.PRNGKey(0)
    k_x, k_m, k_p = jax.random.split(key, 3)

    N, nodes, in_features, out_features = 1, 8, 32, 32

    x = jax.random.normal(k_x, (N, nodes, in_features), jnp.float32)
    mask = (jax.random.uniform(k_m, (N, nodes, nodes)) > 0.5).astype(jnp.float32)
    weight, bias = init_params(k_p, in_features, out_features)

    out = linear_with_mask(x, mask, weight, bias)
    out = jax.block_until_ready(out)

    # Pure-JAX reference of the PyTorch semantics (N = 1).
    y_ref = x[0] @ weight.T + bias                           # (nodes, H_out)
    ref = (mask[0][:, :, None] * y_ref[None, :, :])[None]    # (1, nodes, nodes, H_out)

    assert out.shape == (N, nodes, nodes, out_features)
    assert jnp.allclose(out, ref, atol=1e-5, rtol=1e-5)

    print("KERNEL_OK")
</pallas_src>

<mosaic_0001>
module attributes {stable_mosaic.version = 11 : i64} {
  func.func @_fused_kernel(%arg0: i32, %arg1: i32, %arg2: memref<8x32xf32, #tpu.memory_space<vmem>>, %arg3: memref<32x32xf32, #tpu.memory_space<vmem>>, %arg4: memref<1x32xf32, #tpu.memory_space<vmem>>, %arg5: memref<8x8xf32, #tpu.memory_space<vmem>>, %arg6: memref<8x8x32xf32, #tpu.memory_space<vmem>>) attributes {dimension_semantics = [#tpu.dimension_semantics<parallel>, #tpu.dimension_semantics<parallel>], iteration_bounds = array<i64: 1, 1>, scalar_prefetch = 0 : i64, scratch_operands = 0 : i64, tpu.core_type = #tpu.core_type<tc>, window_params = [{transform_indices = @transform_0, window_bounds = array<i64: 8, 32>}, {pipeline_mode = #tpu.pipeline_mode<synchronous>, transform_indices = @transform_1, window_bounds = array<i64: 32, 32>}, {pipeline_mode = #tpu.pipeline_mode<synchronous>, transform_indices = @transform_2, window_bounds = array<i64: 1, 32>}, {transform_indices = @transform_3, window_bounds = array<i64: 8, 8>}, {transform_indices = @transform_4, window_bounds = array<i64: 8, 8, 32>}]} {
    %c0 = arith.constant 0 : index
    %c0_0 = arith.constant 0 : index
    %0 = vector.load %arg2[%c0, %c0_0] : memref<8x32xf32, #tpu.memory_space<vmem>>, vector<8x32xf32>
    %c0_1 = arith.constant 0 : index
    %c0_2 = arith.constant 0 : index
    %1 = vector.load %arg3[%c0_1, %c0_2] : memref<32x32xf32, #tpu.memory_space<vmem>>, vector<32x32xf32>
    %cst = arith.constant dense<0.000000e+00> : vector<8x32xf32>
    %2 = tpu.matmul %0, %1, %cst {dimension_numbers = #tpu.dot_dimension_numbers<[1], [1], [0], [0], [0, 0, 1, 0], [], []>} : vector<8x32xf32>, vector<32x32xf32>, vector<8x32xf32> -> vector<8x32xf32>
    %c0_3 = arith.constant 0 : index
    %c0_4 = arith.constant 0 : index
    %3 = vector.load %arg4[%c0_3, %c0_4] : memref<1x32xf32, #tpu.memory_space<vmem>>, vector<1x32xf32>
    %4 = vector.broadcast %3 : vector<1x32xf32> to vector<8x32xf32>
    %5 = arith.addf %2, %4 : vector<8x32xf32>
    %c0_5 = arith.constant 0 : index
    %c0_6 = arith.constant 0 : index
    %6 = vector.load %arg5[%c0_5, %c0_6] : memref<8x8xf32, #tpu.memory_space<vmem>>, vector<8x8xf32>
    %7 = vector.shape_cast %6 : vector<8x8xf32> to vector<8x8x1xf32>
    %8 = vector.shape_cast %5 : vector<8x32xf32> to vector<1x8x32xf32>
    %9 = vector.broadcast %7 : vector<8x8x1xf32> to vector<8x8x32xf32>
    %10 = vector.broadcast %8 : vector<1x8x32xf32> to vector<8x8x32xf32>
    %11 = arith.mulf %9, %10 : vector<8x8x32xf32>
    %c0_7 = arith.constant 0 : index
    %c0_8 = arith.constant 0 : index
    %c0_9 = arith.constant 0 : index
    %12 = vector.load %arg6[%c0_7, %c0_8, %c0_9] : memref<8x8x32xf32, #tpu.memory_space<vmem>>, vector<8x8x32xf32>
    tpu.vector_store %arg6[%c0_7, %c0_8, %c0_9], %11 {strides = array<i32>} : memref<8x8x32xf32, #tpu.memory_space<vmem>>, vector<8x8x32xf32>,
    return
  }
  func.func @transform_0(%arg0: i32, %arg1: i32) -> (i32, i32) {
    %c0_i32 = arith.constant 0 : i32
    %c0_i32_0 = arith.constant 0 : i32
    return %arg0, %c0_i32 : i32, i32
  }
  func.func @transform_1(%arg0: i32, %arg1: i32) -> (i32, i32) {
    %c0_i32 = arith.constant 0 : i32
    %c0_i32_0 = arith.constant 0 : i32
    %c0_i32_1 = arith.constant 0 : i32
    return %c0_i32, %c0_i32_0 : i32, i32
  }
  func.func @transform_2(%arg0: i32, %arg1: i32) -> (i32, i32) {
    %c0_i32 = arith.constant 0 : i32
    %c0_i32_0 = arith.constant 0 : i32
    %c0_i32_1 = arith.constant 0 : i32
    return %c0_i32, %c0_i32_0 : i32, i32
  }
  func.func @transform_3(%arg0: i32, %arg1: i32) -> (i32, i32) {
    %c0_i32 = arith.constant 0 : i32
    return %arg1, %arg0 : i32, i32
  }
  func.func @transform_4(%arg0: i32, %arg1: i32) -> (i32, i32, i32) {
    %c0_i32 = arith.constant 0 : i32
    %c0_i32_0 = arith.constant 0 : i32
    return %arg1, %arg0, %c0_i32 : i32, i32, i32
  }
}

</mosaic_0001>

<llo_original>
// kernel: tpu_custom_call.1
$region0: #{tpu_custom_call.1}
  #allocation0 [shape = 'u32[]', space=smem, size = 0x4, offset = 0x4, fixed_abs, tag = 'smem constant byte address 0x4 - core index']
  #allocation1 [shape = 'u32[144,128]{1,0:T(1,128)}', space=vmem, size = 0x12000, scoped, tag = 'internal scratch']
  %s0 = inlined_call_operand.hbm [shape: f32[8,32], index: 0, kind: input, shape index: {}]
  %s1 = inlined_call_operand.hbm [shape: f32[32,32], index: 1, kind: input, shape index: {}]
  %s2 = inlined_call_operand.vmem [shape: f32[1,32], index: 2, kind: input, shape index: {}]
  %s3 = inlined_call_operand.vmem [shape: f32[8,8], index: 3, kind: input, shape index: {}]
  %s4 = inlined_call_operand.hbm [shape: f32[8,8,32], index: 4, kind: output, shape index: {}]
  %s5 = sld [smem:[#allocation0]]
  $region34: #{tpu_custom_call.1} parent=0
    _
  %s7 = ssub.s32 1, %s5
  %s8 = scalar_select 0, %s7, %s5
  $region1: #{tpu_custom_call.1} parent=0
    #allocation2 [shape = 'u8[4096]{0}', space=vmem, size = 0x1000, scoped, tag = 'input window, operand 0, single buffered']
    #allocation3 [shape = 's32[1]{0}', space=sflag, size = 0x4, scoped, tag = 'scoped memory for tpu_custom_call.1']
    #allocation4 [shape = 's32[1]{0}', space=sflag, size = 0x4, scoped, tag = 'scoped memory for tpu_custom_call.1']
    #allocation5 [shape = 'u8[16384]{0}', space=vmem, size = 0x4000, scoped, tag = 'input window, operand 1, single buffered']
    #allocation6 [shape = 's32[1]{0}', space=sflag, size = 0x4, scoped, tag = 'scoped memory for tpu_custom_call.1']
    #allocation7 [shape = 'u8[32768]{0}', space=vmem, size = 0x8000, scoped, tag = 'output window, operand 0, single buffered']
    %9 = vsyncpa [#allocation3], 0
    %10 = vsyncpa [#allocation6], 0
    %11 = vsyncpa [#allocation4], 0
    // Predicated region
    $region2: #{tpu_custom_call.1} parent=1 // pred_check
      _
    $region3: #{tpu_custom_call.1} parent=1 // pred_check_branch
      %13 = sbr.rel (0) target = $region5
    $region4: #{tpu_custom_call.1} parent=1 // pred_region
      %s15 = ssub.s32 128, 128
      %16 = vsyncadd [#allocation3], %s15
      %s18 = sshll.u32 [#allocation2], 4
      %s19 = int_to_ptr.vmem [resolvable:$true] %s18
      %21 = dma.hbm_to_vmem [thread:$0]  %s0, 128, %s19, [#allocation3]
    $region5: #{tpu_custom_call.1} parent=1 // pred_fallthru
      _
    // Predicated region
    $region6: #{tpu_custom_call.1} parent=1 // pred_check
      _
    $region7: #{tpu_custom_call.1} parent=1 // pred_check_branch
      %23 = sbr.rel (0) target = $region9
    $region8: #{tpu_custom_call.1} parent=1 // pred_region
      %s25 = ssub.s32 512, 512
      %26 = vsyncadd [#allocation6], %s25
      %s27 = sshll.u32 [#allocation5], 4
      %s28 = int_to_ptr.vmem [resolvable:$true] %s27
      %33 = dma.hbm_to_vmem [thread:$0]  %s1, 512, %s28, [#allocation6], 128, 128, 8
    $region9: #{tpu_custom_call.1} parent=1 // pred_fallthru
      _
    // Predicated region
    $region10: #{tpu_custom_call.1} parent=1 // pred_check
      _
    $region11: #{tpu_custom_call.1} parent=1 // pred_check_branch
      %35 = sbr.rel (0) target = $region13
    $region12: #{tpu_custom_call.1} parent=1 // pred_region
      _
    $region13: #{tpu_custom_call.1} parent=1 // pred_fallthru
      _
    // Predicated region
    $region14: #{tpu_custom_call.1} parent=1 // pred_check
      _
    $region15: #{tpu_custom_call.1} parent=1 // pred_check_branch
      %37 = sbr.rel (0) target = $region17
    $region16: #{tpu_custom_call.1} parent=1 // pred_region
      _
    $region17: #{tpu_custom_call.1} parent=1 // pred_fallthru
      _
    // Predicated region
    $region18: #{tpu_custom_call.1} parent=1 // pred_check
      _
    $region19: #{tpu_custom_call.1} parent=1 // pred_check_branch
      %39 = sbr.rel (0) target = $region21
    $region20: #{tpu_custom_call.1} parent=1 // pred_region
      %40 = dma.done [#allocation3], 128
    $region21: #{tpu_custom_call.1} parent=1 // pred_fallthru
      _
    // Predicated region
    $region22: #{tpu_custom_call.1} parent=1 // pred_check
      _
    $region23: #{tpu_custom_call.1} parent=1 // pred_check_branch
      %42 = sbr.rel (0) target = $region25
    $region24: #{tpu_custom_call.1} parent=1 // pred_region
      %43 = dma.done [#allocation6], 512
    $region25: #{tpu_custom_call.1} parent=1 // pred_fallthru
      _
    %v44 = vld [vmem:[#allocation2] sm:$0xff]
    %v45 = vld [vmem:[#allocation5] sm:$0xff]
    %v46 = vld [vmem:[#allocation5 + $0x8] sm:$0xff]
    %v47 = vld [vmem:[#allocation5 + $0x10] sm:$0xff]
    %v48 = vld [vmem:[#allocation5 + $0x18] sm:$0xff]
    %v49 = vld [vmem:[%s2] sm:$0x1]
    %v51 = vlaneseq
    %v52 = vshrl.u32 %v51, 7
    %v53 = vsub.s32 0, %v52
    %v54 = vrot.slane %v49, %v53
    %vm56 = vcmask 261120
    %v58 = vsel %vm56, %v44, 0
    %v61 = vsel %vm56, %v45, 0
    %v64 = vsel %vm56, %v46, 0
    %v67 = vsel %vm56, %v47, 0
    %v70 = vsel %vm56, %v48, 0
    %72 = vmatprep.subr.mxu0 0.0
    %73 = vmatpush1.xpose.msra.mxu0 %v61
    %74 = vmatprep.subr.mxu0 0.0
    %75 = vmatpush1.xpose.msra.mxu0 %v64
    %76 = vmatprep.subr.mxu0 0.0
    %77 = vmatpush1.xpose.msra.mxu0 %v67
    %78 = vmatprep.subr.mxu0 0.0
    %79 = vmatpush1.xpose.msra.mxu0 %v70
    %80 = vmatprep.subr.mxu0 0.0
    %81 = vmatpush1.xpose.msra.mxu0 0.0
    %82 = vmatprep.subr.mxu0 0.0
    %83 = vmatpush1.xpose.msra.mxu0 0.0
    %84 = vmatprep.subr.mxu0 0.0
    %85 = vmatpush1.xpose.msra.mxu0 0.0
    %86 = vmatprep.subr.mxu0 0.0
    %87 = vmatpush1.xpose.msra.mxu0 0.0
    %88 = vmatprep.subr.mxu0 0.0
    %89 = vmatpush1.xpose.msra.mxu0 0.0
    %90 = vmatprep.subr.mxu0 0.0
    %91 = vmatpush1.xpose.msra.mxu0 0.0
    %92 = vmatprep.subr.mxu0 0.0
    %93 = vmatpush1.xpose.msra.mxu0 0.0
    %94 = vmatprep.subr.mxu0 0.0
    %95 = vmatpush1.xpose.msra.mxu0 0.0
    %96 = vmatprep.subr.mxu0 0.0
    %97 = vmatpush1.xpose.msra.mxu0 0.0
    %98 = vmatprep.subr.mxu0 0.0
    %99 = vmatpush1.xpose.msra.mxu0 0.0
    %100 = vmatprep.subr.mxu0 0.0
    %101 = vmatpush1.xpose.msra.mxu0 0.0
    %102 = vmatprep.subr.mxu0 0.0
    %103 = vmatpush1.xpose.msra.mxu0 0.0
    %104 = vmatprep.subr.mxu0 0.0
    %105 = vmatpush1.xpose.msra.mxu0 0.0
    %106 = vmatprep.subr.mxu0 0.0
    %107 = vmatpush1.xpose.msra.mxu0 0.0
    %108 = vmatprep.subr.mxu0 0.0
    %109 = vmatpush1.xpose.msra.mxu0 0.0
    %110 = vmatprep.subr.mxu0 0.0
    %111 = vmatpush1.xpose.msra.mxu0 0.0
    %112 = vmatprep.subr.mxu0 0.0
    %113 = vmatpush1.xpose.msra.mxu0 0.0
    %114 = vmatprep.subr.mxu0 0.0
    %115 = vmatpush1.xpose.msra.mxu0 0.0
    %116 = vmatprep.subr.mxu0 0.0
    %117 = vmatpush1.xpose.msra.mxu0 0.0
    %118 = vmatprep.subr.mxu0 0.0
    %119 = vmatpush1.xpose.msra.mxu0 0.0
    %120 = vmatprep.subr.mxu0 0.0
    %121 = vmatpush1.xpose.msra.mxu0 0.0
    %122 = vmatprep.subr.mxu0 0.0
    %123 = vmatpush1.xpose.msra.mxu0 0.0
    %124 = vmatprep.subr.mxu0 0.0
    %125 = vmatpush1.xpose.msra.mxu0 0.0
    %126 = vmatprep.subr.mxu0 0.0
    %127 = vmatpush1.xpose.msra.mxu0 0.0
    %128 = vmatprep.subr.mxu0 0.0
    %129 = vmatpush1.xpose.msra.mxu0 0.0
    %130 = vmatprep.subr.mxu0 0.0
    %131 = vmatpush1.xpose.msra.mxu0 0.0
    %132 = vmatprep.subr.mxu0 0.0
    %133 = vmatpush1.xpose.msra.mxu0 0.0
    %134 = vmatprep.subr.mxu0 0.0
    %135 = vmatpush1.xpose.msra.mxu0 0.0
    %136 = vmatprep.mubr.f32.mxu0 0.0
    %137 = vmatmul.mubr.f32.gmra.mrb[0].mxu0 %v58
    %v138 = vpop.f32.mrb[0].mxu0
    %v139 = vadd.f32 %v54, %v138
    %v140 = vpop.f32.mrb[0].mxu0
    %141 = vdwg.mxu0
    %v142 = vld [vmem:[%s3] sm:$0xff]
    %v143 = vlaneseq
    %v144 = vshrl.u32 %v143, 7
    %v145 = vsub.s32 0, %v144
    %v146 = vrot.slane %v142, %v145
    %148 = vbcast.lane.b32.xlu0 %v146, 256
    %v149 = vpop.permute.xlu0 %148
    %v150 = vlaneseq
    %v151 = vshrl.u32 %v150, 7
    %v152 = vsub.s32 1, %v151
    %v153 = vrot.slane %v142, %v152
    %155 = vbcast.lane.b32.xlu0 %v153, 256
    %v156 = vpop.permute.xlu0 %155
    %v157 = vlaneseq
    %v158 = vshrl.u32 %v157, 7
    %v159 = vsub.s32 2, %v158
    %v160 = vrot.slane %v142, %v159
    %162 = vbcast.lane.b32.xlu0 %v160, 256
    %v163 = vpop.permute.xlu0 %162
    %v164 = vlaneseq
    %v165 = vshrl.u32 %v164, 7
    %v166 = vsub.s32 3, %v165
    %v167 = vrot.slane %v142, %v166
    %169 = vbcast.lane.b32.xlu0 %v167, 256
    %v170 = vpop.permute.xlu0 %169
    %v171 = vlaneseq
    %v172 = vshrl.u32 %v171, 7
    %v173 = vsub.s32 4, %v172
    %v174 = vrot.slane %v142, %v173
    %176 = vbcast.lane.b32.xlu0 %v174, 256
    %v177 = vpop.permute.xlu0 %176
    %v178 = vlaneseq
    %v179 = vshrl.u32 %v178, 7
    %v180 = vsub.s32 5, %v179
    %v181 = vrot.slane %v142, %v180
    %183 = vbcast.lane.b32.xlu0 %v181, 256
    %v184 = vpop.permute.xlu0 %183
    %v185 = vlaneseq
    %v186 = vshrl.u32 %v185, 7
    %v187 = vsub.s32 6, %v186
    %v188 = vrot.slane %v142, %v187
    %190 = vbcast.lane.b32.xlu0 %v188, 256
    %v191 = vpop.permute.xlu0 %190
    %v192 = vlaneseq
    %v193 = vshrl.u32 %v192, 7
    %v194 = vsub.s32 7, %v193
    %v195 = vrot.slane %v142, %v194
    %197 = vbcast.lane.b32.xlu0 %v195, 256
    %v198 = vpop.permute.xlu0 %197
    %v199 = vmul.f32 %v149, %v139
    %v200 = vmul.f32 %v156, %v139
    %v201 = vmul.f32 %v163, %v139
    %v202 = vmul.f32 %v170, %v139
    %v203 = vmul.f32 %v177, %v139
    %v204 = vmul.f32 %v184, %v139
    %v205 = vmul.f32 %v191, %v139
    %v206 = vmul.f32 %v198, %v139
    %207 = vst.msk [vmem:[#allocation7] sm:$0xff] %vm56, %v199
    %208 = vst.msk [vmem:[#allocation7 + $0x8] sm:$0xff] %vm56, %v200
    %209 = vst.msk [vmem:[#allocation7 + $0x10] sm:$0xff] %vm56, %v201
    %210 = vst.msk [vmem:[#allocation7 + $0x18] sm:$0xff] %vm56, %v202
    %211 = vst.msk [vmem:[#allocation7 + $0x20] sm:$0xff] %vm56, %v203
    %212 = vst.msk [vmem:[#allocation7 + $0x28] sm:$0xff] %vm56, %v204
    %213 = vst.msk [vmem:[#allocation7 + $0x30] sm:$0xff] %vm56, %v205
    %214 = vst.msk [vmem:[#allocation7 + $0x38] sm:$0xff] %vm56, %v206
    // Predicated region
    $region26: #{tpu_custom_call.1} parent=1 // pred_check
      _
    $region27: #{tpu_custom_call.1} parent=1 // pred_check_branch
      %216 = sbr.rel (0) target = $region29
    $region28: #{tpu_custom_call.1} parent=1 // pred_region
      %s218 = ssub.s32 1024, 1024
      %219 = vsyncadd [#allocation4], %s218
      %s220 = sshll.u32 [#allocation7], 4
      %s221 = int_to_ptr.vmem [resolvable:$true] %s220
      %226 = dma.vmem_to_hbm [thread:$0]  %s221, 1024, %s4, [#allocation4], 128, 128, 8
    $region29: #{tpu_custom_call.1} parent=1 // pred_fallthru
      _
    // Predicated region
    $region30: #{tpu_custom_call.1} parent=1 // pred_check
      _
    $region31: #{tpu_custom_call.1} parent=1 // pred_check_branch
      %228 = sbr.rel (0) target = $region33
    $region32: #{tpu_custom_call.1} parent=1 // pred_region
      %229 = dma.done [#allocation4], 1024
    $region33: #{tpu_custom_call.1} parent=1 // pred_fallthru
      _
    %230 = vsyncpa [#allocation3], 1
    %231 = vsyncpa [#allocation6], 1
    %232 = vsyncpa [#allocation4], 1

</llo_original>
